<compile_context>
chip_gen: v6e
topology: v6e:2x2x1
jax: 0.10.0
libtpu: 0.0.40
codegen_flags: <defaults>
</compile_context>

<pallas_src>
from collections import OrderedDict, namedtuple

import jax
import jax.numpy as jnp
from jax.experimental import pallas as pl
from jax.experimental.pallas import tpu as pltpu

C_IN = 4
C_OUT = 8
MAX_HW_TILE = 32768        # f32 lane columns per grid step (multiple of 128)


def engine_kernel(x_ref, w_ref, b_ref, o_ref):
    # x_ref: (C_IN, T) lane-dense, w_ref: (C_OUT, C_IN), b_ref: (C_OUT, 1),
    # o_ref: (C_OUT, T)
    x = x_ref[...]
    w = w_ref[...]
    # Channel mix as C_IN broadcast FMAs on the VPU (a K=4 contraction would
    # badly underfill the MXU; VALU slots are free filler in this HBM-bound op).
    y = w[:, 0:1] * x[0:1, :]
    for k in range(1, C_IN):
        y = y + w[:, k:k + 1] * x[k:k + 1, :]
    y = y + b_ref[...]
    # SiLU (sigmoid lowers to the EUP — separate issue slot, effectively free).
    o_ref[...] = (y * jax.nn.sigmoid(y)).astype(o_ref.dtype)


def _choose_hw_tile(hw):
    # Lane-tile must be a multiple of 128 or equal to the full extent.
    if hw % 128 == 0:
        return min(MAX_HW_TILE, hw)
    return hw  # full-extent block is always legal (handles ragged sizes)


def run_engine(x, w, b):
    """x: (N, C_IN, HW) f32  ->  (N, C_OUT, HW) f32."""
    n, cin, hw = x.shape
    cout = w.shape[0]
    t = _choose_hw_tile(hw)
    # Ragged last block (hw % t != 0) is read-padded / write-masked by Pallas.
    grid = (n, pl.cdiv(hw, t))
    return pl.pallas_call(
        engine_kernel,
        out_shape=jax.ShapeDtypeStruct((n, cout, hw), jnp.float32),
        grid_spec=pltpu.PrefetchScalarGridSpec(
            num_scalar_prefetch=0,
            grid=grid,
            in_specs=[
                # image block: batch dim squeezed, channels on sublanes,
                # spatial axis lane-dense (last).
                pl.BlockSpec((None, cin, t), lambda i, j: (i, 0, j)),
                # weight / bias: grid-invariant full-array blocks.
                pl.BlockSpec((cout, cin), lambda i, j: (0, 0)),
                pl.BlockSpec((cout, 1), lambda i, j: (0, 0)),
            ],
            out_specs=pl.BlockSpec((None, cout, t), lambda i, j: (i, 0, j)),
        ),
        compiler_params=pltpu.CompilerParams(
            dimension_semantics=("parallel", "parallel"),
        ),
    )(x, w, b)


Binding = namedtuple("Binding", ("name", "dtype", "shape", "data"))


class TRT:
    """Stand-in for the TensorRT-engine wrapper module.

    # TODO(synk): trt.Runtime.deserialize_cuda_engine / context.execute_v2 run an
    # opaque compiled graph with no Pallas equivalent; the engine body here is a
    # deterministic synthetic 1x1-conv + SiLU head with in-script weights.
    """

    def __init__(self, n, h, w):
        key = jax.random.PRNGKey(0)
        kw, kb = jax.random.split(key)
        # deterministic synthetic "engine weights", stored as (C_OUT, C_IN) so
        # the kernel computes out = W @ X with X lane-dense.
        self.weight = jax.random.normal(kw, (C_OUT, C_IN), jnp.float32) / jnp.sqrt(
            jnp.float32(C_IN)
        )
        self.bias = jax.random.normal(kb, (C_OUT, 1), jnp.float32) * 0.1

        # binding table, mirroring the original OrderedDict of Bindings
        self.output_names = ["output0"]
        self.bindings = OrderedDict()
        self.bindings["images"] = Binding("images", jnp.float32, (n, C_IN, h, w), None)
        self.bindings["output0"] = Binding(
            "output0", jnp.float32, (n, C_OUT, h, w), None
        )

    def forward(self, im):
        n, c, h, w = im.shape
        if c != C_IN:
            raise ValueError(f"'images' binding expects {C_IN} channels, got {c}")
        # dynamic-shape style: refresh binding shapes from the actual input
        # (the __init__ shapes are only the declared profile).
        self.bindings["images"] = Binding("images", jnp.float32, (n, C_IN, h, w), im)

        # "execute_v2": free reshape NCHW -> (N, C, H*W), run the kernel,
        # free reshape back.  No transposes / extra HBM passes.
        x = im.reshape(n, C_IN, h * w)
        out = run_engine(x, self.weight, self.bias).reshape(n, C_OUT, h, w)

        self.bindings["output0"] = Binding("output0", jnp.float32, (n, C_OUT, h, w), out)
        # return output binding tensors, sorted by binding name (as in the original)
        return [self.bindings[x].data for x in sorted(self.output_names)]

    __call__ = forward


if __name__ == "__main__":
    key = jax.random.PRNGKey(0)
    im = jax.random.normal(key, (2, C_IN, 16, 16), jnp.float32)  # NCHW input

    model = TRT(2, 16, 16)
    outs = model(im)
    outs = jax.block_until_ready(outs)

    assert isinstance(outs, list) and len(outs) == 1
    out = outs[0]
    assert out.shape == (2, C_OUT, 16, 16)
    assert out.dtype == jnp.float32

    # pure-JAX reference check of the synthetic engine body
    y_ref = jnp.einsum("oc,nchw->nohw", model.weight, im) + model.bias.reshape(
        1, C_OUT, 1, 1
    )
    ref = y_ref * jax.nn.sigmoid(y_ref)
    assert jnp.allclose(out, ref, atol=1e-5, rtol=1e-5)
    print("KERNEL_OK")
</pallas_src>

<mosaic_0001>
module attributes {stable_mosaic.version = 11 : i64} {
  func.func @engine_kernel(%arg0: i32, %arg1: i32, %arg2: memref<1x4x256xf32, #tpu.memory_space<vmem>>, %arg3: memref<8x4xf32, #tpu.memory_space<vmem>>, %arg4: memref<8x1xf32, #tpu.memory_space<vmem>>, %arg5: memref<1x8x256xf32, #tpu.memory_space<vmem>>) attributes {dimension_semantics = [#tpu.dimension_semantics<parallel>, #tpu.dimension_semantics<parallel>], iteration_bounds = array<i64: 2, 1>, scalar_prefetch = 0 : i64, scratch_operands = 0 : i64, tpu.core_type = #tpu.core_type<tc>, window_params = [{transform_indices = @transform_0, window_bounds = array<i64: 1, 4, 256>}, {pipeline_mode = #tpu.pipeline_mode<synchronous>, transform_indices = @transform_1, window_bounds = array<i64: 8, 4>}, {pipeline_mode = #tpu.pipeline_mode<synchronous>, transform_indices = @transform_2, window_bounds = array<i64: 8, 1>}, {transform_indices = @transform_3, window_bounds = array<i64: 1, 8, 256>}]} {
    %c0 = arith.constant 0 : index
    %c0_0 = arith.constant 0 : index
    %c0_1 = arith.constant 0 : index
    %0 = vector.load %arg2[%c0, %c0_0, %c0_1] : memref<1x4x256xf32, #tpu.memory_space<vmem>>, vector<1x4x256xf32>
    %1 = vector.shape_cast %0 : vector<1x4x256xf32> to vector<4x256xf32>
    %c0_2 = arith.constant 0 : index
    %c0_3 = arith.constant 0 : index
    %2 = vector.load %arg3[%c0_2, %c0_3] : memref<8x4xf32, #tpu.memory_space<vmem>>, vector<8x4xf32>
    %3 = vector.extract_strided_slice %2 {offsets = [0, 0], sizes = [8, 1], strides = [1, 1]} : vector<8x4xf32> to vector<8x1xf32>
    %4 = vector.extract_strided_slice %1 {offsets = [0, 0], sizes = [1, 256], strides = [1, 1]} : vector<4x256xf32> to vector<1x256xf32>
    %5 = vector.broadcast %3 : vector<8x1xf32> to vector<8x256xf32>
    %6 = vector.broadcast %4 : vector<1x256xf32> to vector<8x256xf32>
    %7 = arith.mulf %5, %6 : vector<8x256xf32>
    %8 = vector.extract_strided_slice %2 {offsets = [0, 1], sizes = [8, 1], strides = [1, 1]} : vector<8x4xf32> to vector<8x1xf32>
    %9 = vector.extract_strided_slice %1 {offsets = [1, 0], sizes = [1, 256], strides = [1, 1]} : vector<4x256xf32> to vector<1x256xf32>
    %10 = vector.broadcast %8 : vector<8x1xf32> to vector<8x256xf32>
    %11 = vector.broadcast %9 : vector<1x256xf32> to vector<8x256xf32>
    %12 = arith.mulf %10, %11 : vector<8x256xf32>
    %13 = arith.addf %7, %12 : vector<8x256xf32>
    %14 = vector.extract_strided_slice %2 {offsets = [0, 2], sizes = [8, 1], strides = [1, 1]} : vector<8x4xf32> to vector<8x1xf32>
    %15 = vector.extract_strided_slice %1 {offsets = [2, 0], sizes = [1, 256], strides = [1, 1]} : vector<4x256xf32> to vector<1x256xf32>
    %16 = vector.broadcast %14 : vector<8x1xf32> to vector<8x256xf32>
    %17 = vector.broadcast %15 : vector<1x256xf32> to vector<8x256xf32>
    %18 = arith.mulf %16, %17 : vector<8x256xf32>
    %19 = arith.addf %13, %18 : vector<8x256xf32>
    %20 = vector.extract_strided_slice %2 {offsets = [0, 3], sizes = [8, 1], strides = [1, 1]} : vector<8x4xf32> to vector<8x1xf32>
    %21 = vector.extract_strided_slice %1 {offsets = [3, 0], sizes = [1, 256], strides = [1, 1]} : vector<4x256xf32> to vector<1x256xf32>
    %22 = vector.broadcast %20 : vector<8x1xf32> to vector<8x256xf32>
    %23 = vector.broadcast %21 : vector<1x256xf32> to vector<8x256xf32>
    %24 = arith.mulf %22, %23 : vector<8x256xf32>
    %25 = arith.addf %19, %24 : vector<8x256xf32>
    %c0_4 = arith.constant 0 : index
    %c0_5 = arith.constant 0 : index
    %26 = vector.load %arg4[%c0_4, %c0_5] : memref<8x1xf32, #tpu.memory_space<vmem>>, vector<8x1xf32>
    %27 = vector.broadcast %26 : vector<8x1xf32> to vector<8x256xf32>
    %28 = arith.addf %25, %27 : vector<8x256xf32>
    %29 = arith.negf %28 : vector<8x256xf32>
    %30 = math.exp %29 : vector<8x256xf32>
    %cst = arith.constant 1.000000e+00 : f32
    %31 = vector.broadcast %cst : f32 to vector<8x256xf32>
    %32 = arith.addf %31, %30 : vector<8x256xf32>
    %33 = arith.divf %31, %32 : vector<8x256xf32>
    %34 = arith.mulf %28, %33 : vector<8x256xf32>
    %c0_6 = arith.constant 0 : index
    %c0_7 = arith.constant 0 : index
    %c0_8 = arith.constant 0 : index
    %35 = vector.load %arg5[%c0_6, %c0_7, %c0_8] : memref<1x8x256xf32, #tpu.memory_space<vmem>>, vector<1x8x256xf32>
    %36 = vector.shape_cast %35 : vector<1x8x256xf32> to vector<8x256xf32>
    %37 = vector.shape_cast %34 : vector<8x256xf32> to vector<1x8x256xf32>
    tpu.vector_store %arg5[%c0_6, %c0_7, %c0_8], %37 {strides = array<i32>} : memref<1x8x256xf32, #tpu.memory_space<vmem>>, vector<1x8x256xf32>,
    return
  }
  func.func @transform_0(%arg0: i32, %arg1: i32) -> (i32, i32, i32) {
    %c0_i32 = arith.constant 0 : i32
    %c0_i32_0 = arith.constant 0 : i32
    return %arg0, %c0_i32, %arg1 : i32, i32, i32
  }
  func.func @transform_1(%arg0: i32, %arg1: i32) -> (i32, i32) {
    %c0_i32 = arith.constant 0 : i32
    %c0_i32_0 = arith.constant 0 : i32
    %c0_i32_1 = arith.constant 0 : i32
    return %c0_i32, %c0_i32_0 : i32, i32
  }
  func.func @transform_2(%arg0: i32, %arg1: i32) -> (i32, i32) {
    %c0_i32 = arith.constant 0 : i32
    %c0_i32_0 = arith.constant 0 : i32
    %c0_i32_1 = arith.constant 0 : i32
    return %c0_i32, %c0_i32_0 : i32, i32
  }
  func.func @transform_3(%arg0: i32, %arg1: i32) -> (i32, i32, i32) {
    %c0_i32 = arith.constant 0 : i32
    %c0_i32_0 = arith.constant 0 : i32
    return %arg0, %c0_i32, %arg1 : i32, i32, i32
  }
}

</mosaic_0001>

<llo_original>
// kernel: tpu_custom_call.1
$region0: #{tpu_custom_call.1}
  #allocation0 [shape = 'u32[]', space=smem, size = 0x4, offset = 0x4, fixed_abs, tag = 'smem constant byte address 0x4 - core index']
  #allocation1 [shape = 'u32[144,128]{1,0:T(1,128)}', space=vmem, size = 0x12000, scoped, tag = 'internal scratch']
  %s0 = inlined_call_operand.vmem [shape: f32[2,4,256], index: 0, kind: input, shape index: {}]
  %s1 = inlined_call_operand.vmem [shape: f32[8,4], index: 1, kind: input, shape index: {}]
  %s2 = inlined_call_operand.vmem [shape: f32[8,1], index: 2, kind: input, shape index: {}]
  %s3 = inlined_call_operand.hbm [shape: f32[2,8,256], index: 3, kind: output, shape index: {}]
  %s4 = sld [smem:[#allocation0]]
  $region45: #{tpu_custom_call.1} parent=0
    _
  %s6 = ssub.s32 1, %s4
  %s7 = scalar_select 0, %s6, %s4
  $region1: #{tpu_custom_call.1} parent=0
    #allocation2 [shape = 'u8[16384]{0}', space=vmem, size = 0x4000, scoped, tag = 'output window, operand 0']
    #allocation3 [shape = 's32[2]{0}', space=sflag, size = 0x8, scoped, tag = 'scoped memory for tpu_custom_call.1']
    %8 = vsyncpa [#allocation3], 0
    %s9 = scalar_lea.sflag [#allocation3], 1
    %10 = vsyncpa %s9, 0
    loop: start=0, step=1, limit=4
    $region2: #{tpu_custom_call.1} parent=1 // loop_pre_header
      _
    $region3: #{tpu_custom_call.1} parent=1 // loop_header
      %s12 = sphi 0, %s16
      %p13 = scmp.ge.s32.totalorder %s12, 4
      %s19 = sphi 0, %s31
      %s20 = sphi 0, %s27
      %s21 = sphi 0, %s19
      %s22 = sphi 0, %s20
      %s23 = sphi 0, %s21
      %s24 = sphi 0, %s22
      %s36 = sphi 0, %s38
      %s39 = sphi 0, %s36
      %s40 = sphi 0, %s39
      %s56 = sphi 0, %s40
      %s60 = sphi 0, %s60
      %s62 = sphi 0, %s60
      %s63 = sphi 0, %s62
      %s77 = sphi 0, %s63
      %s81 = sphi 0, %s81
      %s83 = sphi 0, %s81
      %s84 = sphi 0, %s83
      %s98 = sphi 0, %s84
      %s106 = sphi 0, %s108
      %s109 = sphi 0, %s106
      %s110 = sphi 0, %s109
      %s126 = sphi 0, %s110
    $region4: #{tpu_custom_call.1} parent=1 // loop_header_branch
      %15 = sbr.rel (%p13) target = $region8
    $region5: #{tpu_custom_call.1} parent=1 // loop_body
      %s17 = ssub.s32 %s12, 1
      %s18 = ssub.s32 %s12, 2
      %s25 = sadd.s32 1, %s20
      %p26 = scmp.ge.s32.totalorder %s25, 1
      %s27 = scalar_select %p26, 0, %s25
      %s28 = sadd.s32 1, %s19
      %s29 = scalar_select %p26, %s28, %s19
      %p30 = scmp.ge.s32.totalorder %s29, 2
      %s31 = scalar_select %p30, 0, %s29
      %s32 = ssub.s32 %s19, %s31
      %s33 = ssub.s32 %s20, %s27
      %s34 = sor.u32 %s32, %s33
      %p35 = scmp.eq.s32.totalorder %s34, 0
      %s37 = sadd.s32 %s36, 1
      %s38 = scalar_select %p35, %s36, %s37
      %p41 = pneg %p35
      %p42 = scmp.eq.s32.totalorder %s12, 1
      %p43 = por %p41, %p42
      %p44 = scmp.ne.s32.totalorder %s36, %s39
      %p45 = scmp.eq.s32.totalorder %s12, 0
      %p46 = por %p44, %p45
      %p47 = scmp.ne.s32.totalorder %s36, %s39
      %p48 = scmp.eq.s32.totalorder %s17, 1
      %p49 = por %p47, %p48
      %p50 = scmp.ne.s32.totalorder %s39, %s40
      %p51 = scmp.eq.s32.totalorder %s17, 0
      %p52 = por %p50, %p51
      %p53 = scmp.ne.s32.totalorder %s39, %s40
      %p54 = scmp.eq.s32.totalorder %s18, 1
      %p55 = por %p53, %p54
      %p57 = scmp.ne.s32.totalorder %s40, %s56
      %p58 = scmp.eq.s32.totalorder %s18, 0
      %p59 = por %p57, %p58
      %s61 = sadd.s32 %s60, 1
      %p64 = scmp.eq.s32.totalorder %s12, 1
      %p65 = scmp.ne.s32.totalorder %s60, %s62
      %p66 = scmp.eq.s32.totalorder %s12, 0
      %p67 = por %p65, %p66
      %p68 = scmp.ne.s32.totalorder %s60, %s62
      %p69 = scmp.eq.s32.totalorder %s17, 1
      %p70 = por %p68, %p69
      %p71 = scmp.ne.s32.totalorder %s62, %s63
      %p72 = scmp.eq.s32.totalorder %s17, 0
      %p73 = por %p71, %p72
      %p74 = scmp.ne.s32.totalorder %s62, %s63
      %p75 = scmp.eq.s32.totalorder %s18, 1
      %p76 = por %p74, %p75
      %p78 = scmp.ne.s32.totalorder %s63, %s77
      %p79 = scmp.eq.s32.totalorder %s18, 0
      %p80 = por %p78, %p79
      %s82 = sadd.s32 %s81, 1
      %p85 = scmp.eq.s32.totalorder %s12, 1
      %p86 = scmp.ne.s32.totalorder %s81, %s83
      %p87 = scmp.eq.s32.totalorder %s12, 0
      %p88 = por %p86, %p87
      %p89 = scmp.ne.s32.totalorder %s81, %s83
      %p90 = scmp.eq.s32.totalorder %s17, 1
      %p91 = por %p89, %p90
      %p92 = scmp.ne.s32.totalorder %s83, %s84
      %p93 = scmp.eq.s32.totalorder %s17, 0
      %p94 = por %p92, %p93
      %p95 = scmp.ne.s32.totalorder %s83, %s84
      %p96 = scmp.eq.s32.totalorder %s18, 1
      %p97 = por %p95, %p96
      %p99 = scmp.ne.s32.totalorder %s84, %s98
      %p100 = scmp.eq.s32.totalorder %s18, 0
      %p101 = por %p99, %p100
      %s102 = ssub.s32 %s19, %s31
      %s103 = ssub.s32 %s20, %s27
      %s104 = sor.u32 %s102, %s103
      %p105 = scmp.eq.s32.totalorder %s104, 0
      %s107 = sadd.s32 %s106, 1
      %s108 = scalar_select %p105, %s106, %s107
      %p111 = pneg %p105
      %p112 = scmp.eq.s32.totalorder %s12, 1
      %p113 = por %p111, %p112
      %p114 = scmp.ne.s32.totalorder %s106, %s109
      %p115 = scmp.eq.s32.totalorder %s12, 0
      %p116 = por %p114, %p115
      %p117 = scmp.ne.s32.totalorder %s106, %s109
      %p118 = scmp.eq.s32.totalorder %s17, 1
      %p119 = por %p117, %p118
      %p120 = scmp.ne.s32.totalorder %s109, %s110
      %p121 = scmp.eq.s32.totalorder %s17, 0
      %p122 = por %p120, %p121
      %p123 = scmp.ne.s32.totalorder %s109, %s110
      %p124 = scmp.eq.s32.totalorder %s18, 1
      %p125 = por %p123, %p124
      %p127 = scmp.ne.s32.totalorder %s110, %s126
      %p128 = scmp.eq.s32.totalorder %s18, 0
      %p129 = por %p127, %p128
      %p130 = scmp.le.s32.totalorder 1, %s12
      %p131 = scmp.lt.s32.totalorder %s12, 3
      %p132 = pnand %p130, %p131
      %p133 = pneg %p132
      // Predicated region
      $region9: #{tpu_custom_call.1} parent=5 // pred_check
        _
      $region10: #{tpu_custom_call.1} parent=5 // pred_check_branch
        %135 = sbr.rel (%p132) target = $region12
      $region11: #{tpu_custom_call.1} parent=5 // pred_region
        %s136 = ssub.s32 %s12, 1
        // Predicated region
        $region13: #{tpu_custom_call.1} parent=11 // pred_check
          %p137 = pneg %p73
        $region14: #{tpu_custom_call.1} parent=11 // pred_check_branch
          %139 = sbr.rel (%p137) target = $region16
        $region15: #{tpu_custom_call.1} parent=11 // pred_region
          _
        $region16: #{tpu_custom_call.1} parent=11 // pred_fallthru
          _
        // Predicated region
        $region17: #{tpu_custom_call.1} parent=11 // pred_check
          %p140 = pneg %p94
        $region18: #{tpu_custom_call.1} parent=11 // pred_check_branch
          %142 = sbr.rel (%p140) target = $region20
        $region19: #{tpu_custom_call.1} parent=11 // pred_region
          _
        $region20: #{tpu_custom_call.1} parent=11 // pred_fallthru
          _
      $region12: #{tpu_custom_call.1} parent=5 // pred_fallthru
        _
      %p143 = scmp.lt.s32.totalorder %s12, 2
      // Predicated region
      $region21: #{tpu_custom_call.1} parent=5 // pred_check
        %p144 = pneg %p143
      $region22: #{tpu_custom_call.1} parent=5 // pred_check_branch
        %146 = sbr.rel (%p144) target = $region24
      $region23: #{tpu_custom_call.1} parent=5 // pred_region
        // Predicated region
        $region25: #{tpu_custom_call.1} parent=23 // pred_check
          %p147 = pneg %p46
        $region26: #{tpu_custom_call.1} parent=23 // pred_check_branch
          %149 = sbr.rel (%p147) target = $region28
        $region27: #{tpu_custom_call.1} parent=23 // pred_region
          %s150 = smul.u32 2, %s20
          %p151 = scmp.lt.s32.totalorder %s19, 1
          %s152 = scalar_select %p151, %s19, 1
          %p153 = scmp.lt.s32.totalorder %s150, 1
          %s154 = scalar_select %p153, %s150, 1
          %s155 = smul.addr %s152, 2
          %s156 = sadd.s32 %s154, %s155
          %s157 = smul.addr %s156, 4
          %s158 = scalar_lea.vmem %s0, %s157
          %s159 = smul.u32 2, %s20
        $region28: #{tpu_custom_call.1} parent=23 // pred_fallthru
          _
      $region24: #{tpu_custom_call.1} parent=5 // pred_fallthru
        _
      %p160 = scmp.le.s32.totalorder 1, %s12
      %p161 = scmp.lt.s32.totalorder %s12, 3
      %p162 = pnand %p160, %p161
      %p163 = pneg %p162
      // Predicated region
      $region29: #{tpu_custom_call.1} parent=5 // pred_check
        _
      $region30: #{tpu_custom_call.1} parent=5 // pred_check_branch
        %165 = sbr.rel (%p162) target = $region32
      $region31: #{tpu_custom_call.1} parent=5 // pred_region
        %s166 = ssub.s32 %s12, 1
        %s167 = smul.u32 2, %s22
        %p168 = scmp.lt.s32.totalorder %s21, 1
        %s169 = scalar_select %p168, %s21, 1
        %p170 = scmp.lt.s32.totalorder %s167, 1
        %s171 = scalar_select %p170, %s167, 1
        %s172 = smul.addr %s169, 2
        %s173 = sadd.s32 %s171, %s172
        %s174 = smul.addr %s173, 4
        %s175 = scalar_lea.vmem %s0, %s174
        %p176 = pneg %p52
        %p177 = pneg %p49
        %p178 = pneg %p73
        %p179 = pneg %p70
        %p180 = pneg %p94
        %p181 = pneg %p91
        %p182 = pneg %p122
        %p183 = pneg %p119
        %s184 = sand.u32 %s109, 1
        %s185 = scalar_lea.sflag [#allocation3], %s184
        %s186 = sand.u32 %s109, 1
        %s187 = smul.addr %s186, 16
        %s188 = scalar_lea.vmem [#allocation2], %s187
        %s189 = smul.u32 2, %s22
        %p190 = scmp.lt.s32.totalorder %s21, 1
        %s191 = scalar_select %p190, %s21, 1
        %p192 = scmp.lt.s32.totalorder %s189, 1
        %s193 = scalar_select %p192, %s189, 1
        %s194 = smul.addr %s191, 2
        %s195 = sadd.s32 %s193, %s194
        %s196 = smul.addr %s195, 4
        %s197 = scalar_lea.vmem %s0, %s196
        %s198 = smul.u32 2, %s22
        %s199 = smul.u32 2, %s22
        %v200 = vld [vmem:[%s197] sm:$0xff]
        %v201 = vld [vmem:[%s1] sm:$0xff]
        %203 = vset.pattern.permute.xlu0 0
        %204 = vperm.xlu0 %203, %v201
        %v205 = vpop.permute.xlu0 %204
        %v208 = vlaneseq
        %v209 = vshrl.u32 %v208, 7
        %v210 = vsub.s32 0, %v209
        %v211 = vrot.slane %v200, %v210
        %v212 = vlaneseq
        %v213 = vshrl.u32 %v212, 7
        %v214 = vsub.s32 4, %v213
        %v215 = vrot.slane %v200, %v214
        %v218 = vlaneseq
        %v219 = vshrl.u32 %v218, 7
        %v220 = vsub.s32 0, %v219
        %v221 = vrot.slane %v211, %v220
        %v222 = vlaneseq
        %v223 = vshrl.u32 %v222, 7
        %v224 = vsub.s32 0, %v223
        %v225 = vrot.slane %v215, %v224
        %v226 = vmul.f32 %v205, %v221
        %v227 = vmul.f32 %v205, %v225
        %228 = vset.pattern.permute.xlu0 1
        %229 = vperm.xlu0 %228, %v201
        %v230 = vpop.permute.xlu0 %229
        %v232 = vlaneseq
        %v233 = vshrl.u32 %v232, 7
        %v234 = vsub.s32 1, %v233
        %v235 = vrot.slane %v200, %v234
        %v236 = vlaneseq
        %v237 = vshrl.u32 %v236, 7
        %v238 = vsub.s32 5, %v237
        %v239 = vrot.slane %v200, %v238
        %v242 = vlaneseq
        %v243 = vshrl.u32 %v242, 7
        %v244 = vsub.s32 1, %v243
        %v245 = vrot.slane %v235, %v244
        %v246 = vlaneseq
        %v247 = vshrl.u32 %v246, 7
        %v248 = vsub.s32 1, %v247
        %v249 = vrot.slane %v239, %v248
        %v250 = vmul.f32 %v230, %v245
        %v251 = vmul.f32 %v230, %v249
        %v252 = vadd.f32 %v226, %v250
        %v253 = vadd.f32 %v227, %v251
        %254 = vset.pattern.permute.xlu0 2
        %255 = vperm.xlu0 %254, %v201
        %v256 = vpop.permute.xlu0 %255
        %v258 = vlaneseq
        %v259 = vshrl.u32 %v258, 7
        %v260 = vsub.s32 2, %v259
        %v261 = vrot.slane %v200, %v260
        %v262 = vlaneseq
        %v263 = vshrl.u32 %v262, 7
        %v264 = vsub.s32 6, %v263
        %v265 = vrot.slane %v200, %v264
        %v268 = vlaneseq
        %v269 = vshrl.u32 %v268, 7
        %v270 = vsub.s32 2, %v269
        %v271 = vrot.slane %v261, %v270
        %v272 = vlaneseq
        %v273 = vshrl.u32 %v272, 7
        %v274 = vsub.s32 2, %v273
        %v275 = vrot.slane %v265, %v274
        %v276 = vmul.f32 %v256, %v271
        %v277 = vmul.f32 %v256, %v275
        %v278 = vadd.f32 %v252, %v276
        %v279 = vadd.f32 %v253, %v277
        %280 = vset.pattern.permute.xlu0 3
        %281 = vperm.xlu0 %280, %v201
        %v282 = vpop.permute.xlu0 %281
        %v284 = vlaneseq
        %v285 = vshrl.u32 %v284, 7
        %v286 = vsub.s32 3, %v285
        %v287 = vrot.slane %v200, %v286
        %v288 = vlaneseq
        %v289 = vshrl.u32 %v288, 7
        %v290 = vsub.s32 7, %v289
        %v291 = vrot.slane %v200, %v290
        %v294 = vlaneseq
        %v295 = vshrl.u32 %v294, 7
        %v296 = vsub.s32 3, %v295
        %v297 = vrot.slane %v287, %v296
        %v298 = vlaneseq
        %v299 = vshrl.u32 %v298, 7
        %v300 = vsub.s32 3, %v299
        %v301 = vrot.slane %v291, %v300
        %v302 = vmul.f32 %v282, %v297
        %v303 = vmul.f32 %v282, %v301
        %v304 = vadd.f32 %v278, %v302
        %v305 = vadd.f32 %v279, %v303
        %v306 = vld [vmem:[%s2] sm:$0xff]
        %308 = vset.pattern.permute.xlu0 0
        %309 = vperm.xlu0 %308, %v306
        %v310 = vpop.permute.xlu0 %309
        %v312 = vadd.f32 %v304, %v310
        %v313 = vadd.f32 %v305, %v310
        %v314 = vxor.u32 %v312, 2147483648
        %v315 = vxor.u32 %v313, 2147483648
        %v316 = vmul.f32 %v314, 1.442695
        %v317 = vpow.pop %v316
        %v318 = vmul.f32 %v315, 1.442695
        %v319 = vpow.pop %v318
        %v320 = vadd.f32 %v317, 1.0
        %v321 = vadd.f32 %v319, 1.0
        %v322 = vrcp.pop %v320
        %v323 = vmul.f32 1.0, %v322
        %v324 = vrcp.pop %v321
        %v325 = vmul.f32 1.0, %v324
        %v326 = vmul.f32 %v312, %v323
        %v327 = vmul.f32 %v313, %v325
        %328 = vst [vmem:[%s188] sm:$0xff] %v326
        %329 = vst [vmem:[%s188 + $0x8] sm:$0xff] %v327
        %s330 = sand.u32 %s109, 1
        %s331 = scalar_lea.sflag [#allocation3], %s330
        %s332 = sand.u32 %s109, 1
        %s333 = smul.addr %s332, 16
        %s334 = scalar_lea.vmem [#allocation2], %s333
        // Predicated region
        $region33: #{tpu_custom_call.1} parent=31 // pred_check
          %p335 = pneg %p119
        $region34: #{tpu_custom_call.1} parent=31 // pred_check_branch
          %337 = sbr.rel (%p335) target = $region36
        $region35: #{tpu_custom_call.1} parent=31 // pred_region
          %s338 = smul.u32 2, %s22
          %s340 = ssub.s32 256, 256
          %341 = vsyncadd %s331, %s340
          %s342 = smul.addr %s21, 2
          %s343 = sadd.s32 %s338, %s342
          %s344 = smul.addr %s343, 128
          %s345 = scalar_lea.hbm %s3, %s344
          %s347 = sshll.u32 %s334, 4
          %s348 = int_to_ptr.vmem [resolvable:$true] %s347
          %350 = dma.vmem_to_hbm [thread:$0]  %s348, 256, %s345, %s331
        $region36: #{tpu_custom_call.1} parent=31 // pred_fallthru
          _
      $region32: #{tpu_custom_call.1} parent=5 // pred_fallthru
        _
      %p351 = scmp.le.s32.totalorder 2, %s12
      // Predicated region
      $region37: #{tpu_custom_call.1} parent=5 // pred_check
        %p352 = pneg %p351
      $region38: #{tpu_custom_call.1} parent=5 // pred_check_branch
        %354 = sbr.rel (%p352) target = $region40
      $region39: #{tpu_custom_call.1} parent=5 // pred_region
        %s355 = ssub.s32 %s12, 2
        // Predicated region
        $region41: #{tpu_custom_call.1} parent=39 // pred_check
          %p356 = pneg %p125
        $region42: #{tpu_custom_call.1} parent=39 // pred_check_branch
          %358 = sbr.rel (%p356) target = $region44
        $region43: #{tpu_custom_call.1} parent=39 // pred_region
          %s359 = sand.u32 %s110, 1
          %s360 = scalar_lea.sflag [#allocation3], %s359
          %s361 = sand.u32 %s110, 1
          %s362 = smul.addr %s361, 16
          %s363 = scalar_lea.vmem [#allocation2], %s362
          %364 = dma.done %s360, 256
        $region44: #{tpu_custom_call.1} parent=39 // pred_fallthru
          _
      $region40: #{tpu_custom_call.1} parent=5 // pred_fallthru
        _
    $region6: #{tpu_custom_call.1} parent=1 // loop_footer
      %s16 = sadd.s32 1, %s12
    $region7: #{tpu_custom_call.1} parent=1 // loop_footer_branch
      %11 = sbr.rel target = $region3
    $region8: #{tpu_custom_call.1} parent=1 // loop_exit
      _
    %365 = vsyncpa [#allocation3], 1
    %s366 = scalar_lea.sflag [#allocation3], 1
    %367 = vsyncpa %s366, 1

</llo_original>
